<compile_context>
chip_gen: v7x
topology: tpu7x:2x2x1
jax: 0.10.0
libtpu: 0.0.40
codegen_flags: <defaults>
</compile_context>

<pallas_src>
import jax
import jax.numpy as jnp
from jax.experimental import pallas as pl
from jax.experimental.pallas import tpu as pltpu

_LANE = 128
_SUB = 8
_DEFAULT_TILE_ROWS = 1024  # 512 KiB f32 per input block; sweep 512-2048 per gen.


def _make_dice_kernel(tile_rows, rows, tiles_per_slice, need_mask):
    """Build the kernel body with static tile / masking configuration."""
    folds_clean = (tile_rows % _SUB == 0)
    k8 = max(tile_rows // _SUB, 1)

    def kernel(o_ref, m_ref, part_ref, acc_ref):
        s = pl.program_id(0)   # slice (TensorCore shard on v7x)
        t = pl.program_id(1)   # sequential tile index within the slice

        @pl.when(t == 0)
        def _():
            acc_ref[...] = jnp.zeros_like(acc_ref)

        o = o_ref[...].astype(jnp.float32)
        m = m_ref[...].astype(jnp.float32)

        if need_mask:
            # Logical (unclamped) starting row of this tile; anything at or
            # beyond `rows` is padding / a revisited block and must not count.
            start = (s * tiles_per_slice + t) * tile_rows
            rid = jax.lax.broadcasted_iota(jnp.int32, (tile_rows, _LANE), 0)
            valid = (rid + start) < rows
            o = jnp.where(valid, o, 0.0)
            m = jnp.where(valid, m, 0.0)

        om = o * m
        oo = o * o
        mm = m * m

        if folds_clean:
            # Fold rows into (k8, 8, 128) and reduce the leading (untiled)
            # axis: pure vreg-wise VPU adds, no cross-lane traffic per step.
            acc_ref[0] += jnp.sum(om.reshape(k8, _SUB, _LANE), axis=0)
            acc_ref[1] += jnp.sum(oo.reshape(k8, _SUB, _LANE), axis=0)
            acc_ref[2] += jnp.sum(mm.reshape(k8, _SUB, _LANE), axis=0)
        else:
            # Tiny input (< 8 rows and not a multiple of 8): one sublane
            # reduction per step is fine at this size.
            acc_ref[0, 0:1, :] += jnp.sum(om, axis=0, keepdims=True)
            acc_ref[1, 0:1, :] += jnp.sum(oo, axis=0, keepdims=True)
            acc_ref[2, 0:1, :] += jnp.sum(mm, axis=0, keepdims=True)

        @pl.when(t == pl.num_programs(1) - 1)
        def _():
            # Single cross-lane reduction per slice, done once at the end.
            part_ref[0, 0] = jnp.sum(acc_ref[0])   # intersection partial
            part_ref[0, 1] = jnp.sum(acc_ref[1])   # den1 partial
            part_ref[0, 2] = jnp.sum(acc_ref[2])   # den2 partial

    return kernel


def dice_loss_lv(output: jax.Array, mask: jax.Array,
                 tile_rows: int = _DEFAULT_TILE_ROWS) -> jax.Array:
    """Pallas-TPU Dice loss matching DICELoss_LV.forward (returns f32 scalar)."""
    assert output.shape == mask.shape, "output and mask must share a shape"

    o = output.reshape(-1)
    m = mask.reshape(-1)
    # Stream native float dtypes (bf16 halves HBM traffic); only promote
    # non-float inputs (e.g. bool/int masks) so the kernel sees a float ref.
    if not jnp.issubdtype(o.dtype, jnp.floating):
        o = o.astype(jnp.float32)
    if not jnp.issubdtype(m.dtype, jnp.floating):
        m = m.astype(jnp.float32)

    n = o.shape[0]
    # Lane-dense 2-D view.  reshape is copy-free when n % 128 == 0 (the usual
    # NCHW case); only pad to the next lane multiple when it is not.
    if n % _LANE != 0:
        pad = _LANE - n % _LANE
        o = jnp.pad(o, (0, pad))
        m = jnp.pad(m, (0, pad))
    rows = o.shape[0] // _LANE
    o2 = o.reshape(rows, _LANE)
    m2 = m.reshape(rows, _LANE)

    t_rows = min(int(tile_rows), rows)
    tiles_total = pl.cdiv(rows, t_rows)

    # 2-way split on a leading "parallel" axis: one slice per TensorCore on
    # v7x; on 1-TC chips the axis just iterates sequentially (negligible cost).
    n_slices = 2 if tiles_total >= 2 else 1
    tiles_per_slice = pl.cdiv(tiles_total, n_slices)
    need_mask = (n_slices * tiles_per_slice * t_rows) != rows
    max_block = tiles_total - 1

    def in_index_map(s, t):
        # Clamp so the DMA never addresses past the array; fully-overhanging
        # (revisited) blocks are zeroed by the in-kernel mask.
        return (jnp.minimum(s * tiles_per_slice + t, max_block), 0)

    kernel = _make_dice_kernel(t_rows, rows, tiles_per_slice, need_mask)

    partials = pl.pallas_call(
        kernel,
        out_shape=jax.ShapeDtypeStruct((n_slices, 3), jnp.float32),
        grid_spec=pltpu.PrefetchScalarGridSpec(
            num_scalar_prefetch=0,
            grid=(n_slices, tiles_per_slice),
            in_specs=[
                pl.BlockSpec((t_rows, _LANE), in_index_map),
                pl.BlockSpec((t_rows, _LANE), in_index_map),
            ],
            out_specs=pl.BlockSpec((1, 3), lambda s, t: (s, 0),
                                   memory_space=pltpu.SMEM),
            scratch_shapes=[pltpu.VMEM((3, _SUB, _LANE), jnp.float32)],
        ),
        compiler_params=pltpu.CompilerParams(
            dimension_semantics=("parallel", "arbitrary"),
        ),
    )(o2, m2)

    # Tiny epilogue on (n_slices, 3) floats: combine per-core partials and
    # apply the eps / divide exactly as the PyTorch reference does.
    sums = jnp.sum(partials, axis=0)
    eps = jnp.float32(1e-08)
    dice = 2.0 * ((sums[0] + eps) / (sums[1] + sums[2] + eps))
    return jnp.float32(1.0) - dice


def _dice_loss_ref(output, mask):
    """Pure-JAX reference mirroring the PyTorch forward."""
    o = output.astype(jnp.float32)
    m = mask.astype(jnp.float32)
    inter = jnp.sum(o * m)
    den1 = jnp.sum(o * o)
    den2 = jnp.sum(m * m)
    eps = 1e-08
    dice = 2 * ((inter + eps) / (den1 + den2 + eps))
    return 1 - dice


if __name__ == "__main__":
    key = jax.random.PRNGKey(0)
    k1, k2 = jax.random.split(key)
    # Small shapes consistent with a segmentation output/mask pair (NCHW).
    x_shape = (2, 4, 16, 16)
    output = jax.nn.sigmoid(jax.random.normal(k1, x_shape, dtype=jnp.float32))
    mask = (jax.random.uniform(k2, x_shape) > 0.5).astype(jnp.float32)

    loss = dice_loss_lv(output, mask)
    jax.block_until_ready(loss)

    ref = _dice_loss_ref(output, mask)
    assert jnp.allclose(loss, ref, rtol=1e-5, atol=1e-6), (loss, ref)

    print("KERNEL_OK")
</pallas_src>

<mosaic_0001>
module attributes {stable_mosaic.version = 11 : i64} {
  func.func @kernel(%arg0: i32, %arg1: i32, %arg2: memref<16x128xf32, #tpu.memory_space<vmem>>, %arg3: memref<16x128xf32, #tpu.memory_space<vmem>>, %arg4: memref<1x3xf32, #tpu.memory_space<smem>>, %arg5: memref<3x8x128xf32, #tpu.memory_space<vmem>>) attributes {dimension_semantics = [#tpu.dimension_semantics<parallel>, #tpu.dimension_semantics<arbitrary>], iteration_bounds = array<i64: 1, 1>, scalar_prefetch = 0 : i64, scratch_operands = 1 : i64, tpu.core_type = #tpu.core_type<tc>, window_params = [{transform_indices = @transform_0, window_bounds = array<i64: 16, 128>}, {transform_indices = @transform_1, window_bounds = array<i64: 16, 128>}, {transform_indices = @transform_2, window_bounds = array<i64: 1, 3>}]} {
    %c0_i32 = arith.constant 0 : i32
    %0 = arith.cmpi eq, %arg1, %c0_i32 : i32
    %1 = arith.extui %0 : i1 to i32
    %c0_i32_0 = arith.constant 0 : i32
    %2 = arith.cmpi ne, %1, %c0_i32_0 : i32
    scf.if %2 {
      %cst_24 = arith.constant 0.000000e+00 : f32
      %35 = vector.broadcast %cst_24 : f32 to vector<3x8x128xf32>
      %c0_25 = arith.constant 0 : index
      %c0_26 = arith.constant 0 : index
      %c0_27 = arith.constant 0 : index
      %36 = vector.load %arg5[%c0_25, %c0_26, %c0_27] : memref<3x8x128xf32, #tpu.memory_space<vmem>>, vector<3x8x128xf32>
      tpu.vector_store %arg5[%c0_25, %c0_26, %c0_27], %35 {strides = array<i32>} : memref<3x8x128xf32, #tpu.memory_space<vmem>>, vector<3x8x128xf32>,
    } else {
    }
    %c0 = arith.constant 0 : index
    %c0_1 = arith.constant 0 : index
    %3 = vector.load %arg2[%c0, %c0_1] : memref<16x128xf32, #tpu.memory_space<vmem>>, vector<16x128xf32>
    %c0_2 = arith.constant 0 : index
    %c0_3 = arith.constant 0 : index
    %4 = vector.load %arg3[%c0_2, %c0_3] : memref<16x128xf32, #tpu.memory_space<vmem>>, vector<16x128xf32>
    %5 = arith.mulf %3, %4 : vector<16x128xf32>
    %6 = arith.mulf %3, %3 : vector<16x128xf32>
    %7 = arith.mulf %4, %4 : vector<16x128xf32>
    %c0_4 = arith.constant 0 : index
    %c0_5 = arith.constant 0 : index
    %c0_6 = arith.constant 0 : index
    %8 = vector.load %arg5[%c0_4, %c0_5, %c0_6] : memref<3x8x128xf32, #tpu.memory_space<vmem>>, vector<1x8x128xf32>
    %9 = vector.shape_cast %8 : vector<1x8x128xf32> to vector<8x128xf32>
    %10 = vector.shape_cast %5 : vector<16x128xf32> to vector<2x8x128xf32>
    %cst = arith.constant dense<0.000000e+00> : vector<8x128xf32>
    %11 = vector.multi_reduction <add>, %10, %cst [0] : vector<2x8x128xf32> to vector<8x128xf32>
    %12 = arith.addf %9, %11 : vector<8x128xf32>
    %c0_7 = arith.constant 0 : index
    %c0_8 = arith.constant 0 : index
    %c0_9 = arith.constant 0 : index
    %13 = vector.load %arg5[%c0_7, %c0_8, %c0_9] : memref<3x8x128xf32, #tpu.memory_space<vmem>>, vector<1x8x128xf32>
    %14 = vector.shape_cast %13 : vector<1x8x128xf32> to vector<8x128xf32>
    %15 = vector.shape_cast %12 : vector<8x128xf32> to vector<1x8x128xf32>
    tpu.vector_store %arg5[%c0_7, %c0_8, %c0_9], %15 {strides = array<i32>} : memref<3x8x128xf32, #tpu.memory_space<vmem>>, vector<1x8x128xf32>,
    %c1 = arith.constant 1 : index
    %c0_10 = arith.constant 0 : index
    %c0_11 = arith.constant 0 : index
    %16 = vector.load %arg5[%c1, %c0_10, %c0_11] : memref<3x8x128xf32, #tpu.memory_space<vmem>>, vector<1x8x128xf32>
    %17 = vector.shape_cast %16 : vector<1x8x128xf32> to vector<8x128xf32>
    %18 = vector.shape_cast %6 : vector<16x128xf32> to vector<2x8x128xf32>
    %cst_12 = arith.constant dense<0.000000e+00> : vector<8x128xf32>
    %19 = vector.multi_reduction <add>, %18, %cst_12 [0] : vector<2x8x128xf32> to vector<8x128xf32>
    %20 = arith.addf %17, %19 : vector<8x128xf32>
    %c1_13 = arith.constant 1 : index
    %c0_14 = arith.constant 0 : index
    %c0_15 = arith.constant 0 : index
    %21 = vector.load %arg5[%c1_13, %c0_14, %c0_15] : memref<3x8x128xf32, #tpu.memory_space<vmem>>, vector<1x8x128xf32>
    %22 = vector.shape_cast %21 : vector<1x8x128xf32> to vector<8x128xf32>
    %23 = vector.shape_cast %20 : vector<8x128xf32> to vector<1x8x128xf32>
    tpu.vector_store %arg5[%c1_13, %c0_14, %c0_15], %23 {strides = array<i32>} : memref<3x8x128xf32, #tpu.memory_space<vmem>>, vector<1x8x128xf32>,
    %c2 = arith.constant 2 : index
    %c0_16 = arith.constant 0 : index
    %c0_17 = arith.constant 0 : index
    %24 = vector.load %arg5[%c2, %c0_16, %c0_17] : memref<3x8x128xf32, #tpu.memory_space<vmem>>, vector<1x8x128xf32>
    %25 = vector.shape_cast %24 : vector<1x8x128xf32> to vector<8x128xf32>
    %26 = vector.shape_cast %7 : vector<16x128xf32> to vector<2x8x128xf32>
    %cst_18 = arith.constant dense<0.000000e+00> : vector<8x128xf32>
    %27 = vector.multi_reduction <add>, %26, %cst_18 [0] : vector<2x8x128xf32> to vector<8x128xf32>
    %28 = arith.addf %25, %27 : vector<8x128xf32>
    %c2_19 = arith.constant 2 : index
    %c0_20 = arith.constant 0 : index
    %c0_21 = arith.constant 0 : index
    %29 = vector.load %arg5[%c2_19, %c0_20, %c0_21] : memref<3x8x128xf32, #tpu.memory_space<vmem>>, vector<1x8x128xf32>
    %30 = vector.shape_cast %29 : vector<1x8x128xf32> to vector<8x128xf32>
    %31 = vector.shape_cast %28 : vector<8x128xf32> to vector<1x8x128xf32>
    tpu.vector_store %arg5[%c2_19, %c0_20, %c0_21], %31 {strides = array<i32>} : memref<3x8x128xf32, #tpu.memory_space<vmem>>, vector<1x8x128xf32>,
    %c0_i32_22 = arith.constant 0 : i32
    %32 = arith.cmpi eq, %arg1, %c0_i32_22 : i32
    %33 = arith.extui %32 : i1 to i32
    %c0_i32_23 = arith.constant 0 : i32
    %34 = arith.cmpi ne, %33, %c0_i32_23 : i32
    scf.if %34 {
      %c0_24 = arith.constant 0 : index
      %c0_25 = arith.constant 0 : index
      %c0_26 = arith.constant 0 : index
      %35 = vector.load %arg5[%c0_24, %c0_25, %c0_26] : memref<3x8x128xf32, #tpu.memory_space<vmem>>, vector<1x8x128xf32>
      %36 = vector.shape_cast %35 : vector<1x8x128xf32> to vector<8x128xf32>
      %37 = vector.shape_cast %36 : vector<8x128xf32> to vector<1x8x128xf32>
      %cst_27 = arith.constant dense<0.000000e+00> : vector<1xf32>
      %38 = vector.multi_reduction <add>, %37, %cst_27 [1, 2] : vector<1x8x128xf32> to vector<1xf32>
      %39 = vector.shape_cast %38 : vector<1xf32> to vector<1x1x1xf32>
      %40 = vector.extract %39[0, 0, 0] : f32 from vector<1x1x1xf32>
      %c0_28 = arith.constant 0 : index
      %c0_29 = arith.constant 0 : index
      %41 = memref.load %arg4[%c0_28, %c0_29] : memref<1x3xf32, #tpu.memory_space<smem>>
      memref.store %40, %arg4[%c0_28, %c0_29] : memref<1x3xf32, #tpu.memory_space<smem>>
      %c1_30 = arith.constant 1 : index
      %c0_31 = arith.constant 0 : index
      %c0_32 = arith.constant 0 : index
      %42 = vector.load %arg5[%c1_30, %c0_31, %c0_32] : memref<3x8x128xf32, #tpu.memory_space<vmem>>, vector<1x8x128xf32>
      %43 = vector.shape_cast %42 : vector<1x8x128xf32> to vector<8x128xf32>
      %44 = vector.shape_cast %43 : vector<8x128xf32> to vector<1x8x128xf32>
      %cst_33 = arith.constant dense<0.000000e+00> : vector<1xf32>
      %45 = vector.multi_reduction <add>, %44, %cst_33 [1, 2] : vector<1x8x128xf32> to vector<1xf32>
      %46 = vector.shape_cast %45 : vector<1xf32> to vector<1x1x1xf32>
      %47 = vector.extract %46[0, 0, 0] : f32 from vector<1x1x1xf32>
      %c0_34 = arith.constant 0 : index
      %c1_35 = arith.constant 1 : index
      %48 = memref.load %arg4[%c0_34, %c1_35] : memref<1x3xf32, #tpu.memory_space<smem>>
      memref.store %47, %arg4[%c0_34, %c1_35] : memref<1x3xf32, #tpu.memory_space<smem>>
      %c2_36 = arith.constant 2 : index
      %c0_37 = arith.constant 0 : index
      %c0_38 = arith.constant 0 : index
      %49 = vector.load %arg5[%c2_36, %c0_37, %c0_38] : memref<3x8x128xf32, #tpu.memory_space<vmem>>, vector<1x8x128xf32>
      %50 = vector.shape_cast %49 : vector<1x8x128xf32> to vector<8x128xf32>
      %51 = vector.shape_cast %50 : vector<8x128xf32> to vector<1x8x128xf32>
      %cst_39 = arith.constant dense<0.000000e+00> : vector<1xf32>
      %52 = vector.multi_reduction <add>, %51, %cst_39 [1, 2] : vector<1x8x128xf32> to vector<1xf32>
      %53 = vector.shape_cast %52 : vector<1xf32> to vector<1x1x1xf32>
      %54 = vector.extract %53[0, 0, 0] : f32 from vector<1x1x1xf32>
      %c0_40 = arith.constant 0 : index
      %c2_41 = arith.constant 2 : index
      %55 = memref.load %arg4[%c0_40, %c2_41] : memref<1x3xf32, #tpu.memory_space<smem>>
      memref.store %54, %arg4[%c0_40, %c2_41] : memref<1x3xf32, #tpu.memory_space<smem>>
    } else {
    }
    return
  }
  func.func @transform_0(%arg0: i32, %arg1: i32) -> (i32, i32) {
    %c1_i32 = arith.constant 1 : i32
    %0 = arith.muli %arg0, %c1_i32 : i32
    %1 = arith.addi %0, %arg1 : i32
    %c0_i32 = arith.constant 0 : i32
    %2 = arith.minsi %1, %c0_i32 : i32
    %c0_i32_0 = arith.constant 0 : i32
    %c0_i32_1 = arith.constant 0 : i32
    return %2, %c0_i32_0 : i32, i32
  }
  func.func @transform_1(%arg0: i32, %arg1: i32) -> (i32, i32) {
    %c1_i32 = arith.constant 1 : i32
    %0 = arith.muli %arg0, %c1_i32 : i32
    %1 = arith.addi %0, %arg1 : i32
    %c0_i32 = arith.constant 0 : i32
    %2 = arith.minsi %1, %c0_i32 : i32
    %c0_i32_0 = arith.constant 0 : i32
    %c0_i32_1 = arith.constant 0 : i32
    return %2, %c0_i32_0 : i32, i32
  }
  func.func @transform_2(%arg0: i32, %arg1: i32) -> (i32, i32) {
    %c0_i32 = arith.constant 0 : i32
    %c0_i32_0 = arith.constant 0 : i32
    return %arg0, %c0_i32 : i32, i32
  }
}

</mosaic_0001>

<llo_original>
// kernel: tpu_custom_call.1
$region0: #{tpu_custom_call.1}
  #allocation0 [shape = 'u32[]', space=smem, size = 0x4, offset = 0x4, fixed_abs, tag = 'smem constant byte address 0x4 - core index']
  #allocation1 [shape = 'u32[144,128]{1,0:T(1,128)}', space=vmem, size = 0x12000, scoped, tag = 'internal scratch']
  #allocation2 [shape = 'f32[3,8,128]{2,1,0:T(8,128)}', space=vmem, size = 0x3000, scoped, tag = 'scratch operand']
  %s0 = inlined_call_operand.hbm [shape: f32[16,128], index: 0, kind: input, shape index: {}]
  %s1 = inlined_call_operand.hbm [shape: f32[16,128], index: 1, kind: input, shape index: {}]
  %s2 = inlined_call_operand.hbm [shape: f32[1,3], index: 2, kind: output, shape index: {}]
  %s3 = sld [smem:[#allocation0]]
  $region34: #{tpu_custom_call.1} parent=0
    _
  %s5 = ssub.s32 1, %s3
  %s6 = scalar_select 0, %s5, %s3
  $region1: #{tpu_custom_call.1} parent=0
    #allocation3 [shape = 'u8[8192]{0}', space=vmem, size = 0x2000, scoped, tag = 'input window, operand 0, single buffered']
    #allocation4 [shape = 's32[1]{0}', space=sflag, size = 0x4, scoped, tag = 'scoped memory for tpu_custom_call.1']
    #allocation5 [shape = 's32[1]{0}', space=sflag, size = 0x4, scoped, tag = 'scoped memory for tpu_custom_call.1']
    #allocation6 [shape = 'u8[8192]{0}', space=vmem, size = 0x2000, scoped, tag = 'input window, operand 1, single buffered']
    #allocation7 [shape = 's32[1]{0}', space=sflag, size = 0x4, scoped, tag = 'scoped memory for tpu_custom_call.1']
    #allocation8 [shape = 'u8[512]{0}', space=smem, size = 0x200, scoped, tag = 'output window, operand 0, single buffered']
    %7 = vsyncpa [#allocation4], 0
    %8 = vsyncpa [#allocation7], 0
    %9 = vsyncpa [#allocation5], 0
    // Predicated region
    $region2: #{tpu_custom_call.1} parent=1 // pred_check
      _
    $region3: #{tpu_custom_call.1} parent=1 // pred_check_branch
      %11 = sbr.rel (0) target = $region5
    $region4: #{tpu_custom_call.1} parent=1 // pred_region
      %s12 = sadd.s32 0, 0
      %p13 = scmp.lt.s32.totalorder %s12, 0
      %s14 = scalar_select %p13, %s12, 0
      %s15 = smul.u32 2, %s14
      %s17 = ssub.s32 256, 256
      %18 = vsyncadd [#allocation4], %s17
      %s19 = smul.addr %s15, 128
      %s20 = scalar_lea.hbm %s0, %s19
      %s21 = sshll.u32 [#allocation3], 4
      %s22 = int_to_ptr.vmem [resolvable:$true] %s21
      %27 = dma.hbm_to_vmem [thread:$0]  %s20, 256, %s22, [#allocation4], 128, 128, 8
    $region5: #{tpu_custom_call.1} parent=1 // pred_fallthru
      _
    // Predicated region
    $region6: #{tpu_custom_call.1} parent=1 // pred_check
      _
    $region7: #{tpu_custom_call.1} parent=1 // pred_check_branch
      %29 = sbr.rel (0) target = $region9
    $region8: #{tpu_custom_call.1} parent=1 // pred_region
      %s30 = sadd.s32 0, 0
      %p31 = scmp.lt.s32.totalorder %s30, 0
      %s32 = scalar_select %p31, %s30, 0
      %s33 = smul.u32 2, %s32
      %s35 = ssub.s32 256, 256
      %36 = vsyncadd [#allocation7], %s35
      %s37 = smul.addr %s33, 128
      %s38 = scalar_lea.hbm %s1, %s37
      %s39 = sshll.u32 [#allocation6], 4
      %s40 = int_to_ptr.vmem [resolvable:$true] %s39
      %45 = dma.hbm_to_vmem [thread:$0]  %s38, 256, %s40, [#allocation7], 128, 128, 8
    $region9: #{tpu_custom_call.1} parent=1 // pred_fallthru
      _
    // Predicated region
    $region10: #{tpu_custom_call.1} parent=1 // pred_check
      _
    $region11: #{tpu_custom_call.1} parent=1 // pred_check_branch
      %47 = sbr.rel (0) target = $region13
    $region12: #{tpu_custom_call.1} parent=1 // pred_region
      %48 = dma.done [#allocation4], 256
    $region13: #{tpu_custom_call.1} parent=1 // pred_fallthru
      _
    // Predicated region
    $region14: #{tpu_custom_call.1} parent=1 // pred_check
      _
    $region15: #{tpu_custom_call.1} parent=1 // pred_check_branch
      %50 = sbr.rel (0) target = $region17
    $region16: #{tpu_custom_call.1} parent=1 // pred_region
      %51 = dma.done [#allocation7], 256
    $region17: #{tpu_custom_call.1} parent=1 // pred_fallthru
      _
    %s52 = sadd.s32 0, 0
    %p53 = scmp.lt.s32.totalorder %s52, 0
    %s54 = scalar_select %p53, %s52, 0
    %s55 = smul.u32 2, %s54
    %s56 = sadd.s32 0, 0
    %p57 = scmp.lt.s32.totalorder %s56, 0
    %s58 = scalar_select %p57, %s56, 0
    %s59 = smul.u32 2, %s58
    %p60 = scmp.eq.s32.totalorder 0, 0
    // Predicated region
    $region18: #{tpu_custom_call.1} parent=1 // pred_check
      %p61 = pneg %p60
    $region19: #{tpu_custom_call.1} parent=1 // pred_check_branch
      %63 = sbr.rel (%p61) target = $region21
    $region20: #{tpu_custom_call.1} parent=1 // pred_region
      %64 = vst [vmem:[#allocation2] sm:$0xff] 0.0
      %65 = vst [vmem:[#allocation2 + $0x8] sm:$0xff] 0.0
      %66 = vst [vmem:[#allocation2 + $0x10] sm:$0xff] 0.0
    $region21: #{tpu_custom_call.1} parent=1 // pred_fallthru
      _
    %v67 = vld [vmem:[#allocation3] sm:$0xff]
    %v68 = vld [vmem:[#allocation3 + $0x8] sm:$0xff]
    %v69 = vld [vmem:[#allocation6] sm:$0xff]
    %v70 = vld [vmem:[#allocation6 + $0x8] sm:$0xff]
    %v71 = vmul.f32 %v67, %v69
    %v72 = vmul.f32 %v68, %v70
    %v73 = vmul.f32 %v67, %v67
    %v74 = vmul.f32 %v68, %v68
    %v75 = vmul.f32 %v69, %v69
    %v76 = vmul.f32 %v70, %v70
    %v77 = vld [vmem:[#allocation2] sm:$0xff]
    %v78 = vadd.f32 %v71, %v72
    %v79 = vadd.f32 %v77, %v78
    %80 = vst [vmem:[#allocation2] sm:$0xff] %v79
    %s81 = scalar_lea.vmem [#allocation2], 8
    %v82 = vld [vmem:[%s81] sm:$0xff]
    %v83 = vadd.f32 %v73, %v74
    %v84 = vadd.f32 %v82, %v83
    %85 = vst [vmem:[%s81] sm:$0xff] %v84
    %s86 = scalar_lea.vmem [#allocation2], 16
    %v87 = vld [vmem:[%s86] sm:$0xff]
    %v88 = vadd.f32 %v75, %v76
    %v89 = vadd.f32 %v87, %v88
    %90 = vst [vmem:[%s86] sm:$0xff] %v89
    // Predicated region
    $region22: #{tpu_custom_call.1} parent=1 // pred_check
      %p91 = pneg %p60
    $region23: #{tpu_custom_call.1} parent=1 // pred_check_branch
      %93 = sbr.rel (%p91) target = $region25
    $region24: #{tpu_custom_call.1} parent=1 // pred_region
      %v94 = vld [vmem:[#allocation2] sm:$0xff]
      %95 = vadd.xlane.f32.xlu0 %v94
      %v96 = vpop.xlane.xlu0 %95
      %v97 = vrot.slane %v96, 4
      %v98 = vadd.f32 %v96, %v97
      %v99 = vrot.slane %v98, 2
      %v100 = vadd.f32 %v98, %v99
      %v101 = vrot.slane %v100, 1
      %v102 = vadd.f32 %v100, %v101
      %s103 = vtos %v102
      %s104 = scalar_lea.smem [#allocation8], 0
      %105 = sst [smem:[%s104]] %s103
      %v106 = vld [vmem:[%s81] sm:$0xff]
      %107 = vadd.xlane.f32.xlu0 %v106
      %v108 = vpop.xlane.xlu0 %107
      %v109 = vrot.slane %v108, 4
      %v110 = vadd.f32 %v108, %v109
      %v111 = vrot.slane %v110, 2
      %v112 = vadd.f32 %v110, %v111
      %v113 = vrot.slane %v112, 1
      %v114 = vadd.f32 %v112, %v113
      %s115 = vtos %v114
      %s116 = scalar_lea.smem [#allocation8], 1
      %117 = sst [smem:[%s116]] %s115
      %v118 = vld [vmem:[%s86] sm:$0xff]
      %119 = vadd.xlane.f32.xlu0 %v118
      %v120 = vpop.xlane.xlu0 %119
      %v121 = vrot.slane %v120, 4
      %v122 = vadd.f32 %v120, %v121
      %v123 = vrot.slane %v122, 2
      %v124 = vadd.f32 %v122, %v123
      %v125 = vrot.slane %v124, 1
      %v126 = vadd.f32 %v124, %v125
      %s127 = vtos %v126
      %s128 = scalar_lea.smem [#allocation8], 2
      %129 = sst [smem:[%s128]] %s127
    $region25: #{tpu_custom_call.1} parent=1 // pred_fallthru
      _
    // Predicated region
    $region26: #{tpu_custom_call.1} parent=1 // pred_check
      _
    $region27: #{tpu_custom_call.1} parent=1 // pred_check_branch
      %131 = sbr.rel (0) target = $region29
    $region28: #{tpu_custom_call.1} parent=1 // pred_region
      %s133 = ssub.s32 16, 16
      %134 = vsyncadd [#allocation5], %s133
      %137 = dma.smem_to_hbm [#allocation8], 16, %s2, [#allocation5]
    $region29: #{tpu_custom_call.1} parent=1 // pred_fallthru
      _
    // Predicated region
    $region30: #{tpu_custom_call.1} parent=1 // pred_check
      _
    $region31: #{tpu_custom_call.1} parent=1 // pred_check_branch
      %139 = sbr.rel (0) target = $region33
    $region32: #{tpu_custom_call.1} parent=1 // pred_region
      %140 = dma.done [#allocation5], 16
    $region33: #{tpu_custom_call.1} parent=1 // pred_fallthru
      _
    %141 = sfence
    %142 = vsyncpa [#allocation4], 1
    %143 = vsyncpa [#allocation7], 1
    %144 = vsyncpa [#allocation5], 1

</llo_original>
